<compile_context>
chip_gen: v6e
topology: v6e:2x2x1
jax: 0.10.0
libtpu: 0.0.40
codegen_flags: <defaults>
</compile_context>

<pallas_src>
import math
from functools import partial

import jax
import jax.numpy as jnp
from jax.experimental import pallas as pl
from jax.experimental.pallas import tpu as pltpu


def _vmem_limit_bytes(default=48 * 1024 * 1024):
    """~80% of physical VMEM (v5e/v6e: ~102 MiB, v7x: ~51 MiB); safe fallback."""
    try:
        info_fn = getattr(pltpu, "get_tpu_info", None)
        if info_fn is None:
            return default
        cap = getattr(info_fn(), "vmem_capacity_bytes", None)
        if not cap:
            return default
        return max(default, min(int(cap * 0.8), 112 * 1024 * 1024))
    except Exception:
        return default


def _layernorm(x, eps=1e-6):
    mu = jnp.mean(x, axis=-1, keepdims=True)
    var = jnp.mean(jnp.square(x - mu), axis=-1, keepdims=True)
    return (x - mu) * jax.lax.rsqrt(var + eps)


def _gelu_tanh(x):
    c = math.sqrt(2.0 / math.pi)
    return 0.5 * x * (1.0 + jnp.tanh(c * (x + 0.044715 * x * x * x)))


# --------------------------------------------------------------------------- #
# Kernel 1: AdaLN-modulated LayerNorm + fused QKV projection
# --------------------------------------------------------------------------- #
def _qkv_kernel(num_heads, head_dim, scale,
                mod_ref, x_ref, wqkv_ref, bqkv_ref,
                q_ref, k_ref, v_ref):
    x = x_ref[0].astype(jnp.float32)            # (ts, D)
    mod = mod_ref[0]                            # (6, D): shift/scale/gate table
    shift_msa, scale_msa = mod[0:1, :], mod[1:2, :]

    nx = _layernorm(x) * (1.0 + scale_msa) + shift_msa
    nx_b = nx.astype(wqkv_ref.dtype)            # bf16 for the MXU, f32 accumulate

    # One fused (ts, D) @ (D, 3D) MXU launch instead of three N=D launches.
    qkv = jnp.dot(nx_b, wqkv_ref[...], preferred_element_type=jnp.float32) + bqkv_ref[...]

    ts, D = x.shape
    q = qkv[:, :D] * scale                      # fold 1/sqrt(head_dim) into q once
    k = qkv[:, D:2 * D]
    v = qkv[:, 2 * D:]

    def to_heads(t):                            # (ts, D) -> (H, ts, hd)
        return jnp.transpose(t.reshape(ts, num_heads, head_dim), (1, 0, 2))

    q_ref[...] = to_heads(q).astype(q_ref.dtype)[None]
    k_ref[...] = to_heads(k).astype(k_ref.dtype)[None]
    v_ref[...] = to_heads(v).astype(v_ref.dtype)[None]


# --------------------------------------------------------------------------- #
# Kernel 2: flash attention (online softmax, head-chunked) + out-proj + norm2
#           + inner-dim-tiled FFN + both gated residuals
# --------------------------------------------------------------------------- #
def _attn_ffn_kernel(head_chunk, ff_chunk,
                     mod_ref, x_ref, q_ref, k_ref, v_ref,
                     wo_ref, bo_ref, w1_ref, b1_ref, w2_ref, b2_ref,
                     out_ref, m_sc, l_sc, acc_sc):
    kv = pl.program_id(2)

    @pl.when(kv == 0)
    def _():
        m_sc[...] = jnp.full_like(m_sc, -jnp.inf)
        l_sc[...] = jnp.zeros_like(l_sc)
        acc_sc[...] = jnp.zeros_like(acc_sc)

    num_heads = q_ref.shape[1]
    n_hc = num_heads // head_chunk

    def hc_body(c, carry):
        # Head chunking bounds the (hc, tq, tkv) score/softmax temps.
        h0 = pl.multiple_of(c * head_chunk, head_chunk)
        hsl = pl.ds(h0, head_chunk)
        q = q_ref[0, hsl, :, :]                 # (hc, tq, hd) bf16, q pre-scaled
        k = k_ref[0, hsl, :, :]                 # (hc, tkv, hd) bf16
        v = v_ref[0, hsl, :, :]                 # (hc, tkv, hd) bf16

        # Batched-over-heads score contraction: one dot_general, no k.T, no unroll.
        s = jnp.einsum("hqd,hkd->hqk", q, k, preferred_element_type=jnp.float32)

        m_prev = m_sc[hsl, :]                   # (hc, tq)
        m_new = jnp.maximum(m_prev, jnp.max(s, axis=-1))
        alpha = jnp.exp(m_prev - m_new)
        p = jnp.exp(s - m_new[..., None])       # f32 exp (see bf16-exp TODO above)
        l_sc[hsl, :] = alpha * l_sc[hsl, :] + jnp.sum(p, axis=-1)
        acc_sc[hsl, :, :] = (
            alpha[..., None] * acc_sc[hsl, :, :]
            + jnp.einsum("hqk,hkd->hqd", p.astype(v.dtype), v,
                         preferred_element_type=jnp.float32))
        m_sc[hsl, :] = m_new
        return carry

    jax.lax.fori_loop(0, n_hc, hc_body, None)

    @pl.when(kv == pl.num_programs(2) - 1)
    def _():
        # Normalize (EUP reciprocal) and merge heads -> (tq, D).
        inv_l = pl.reciprocal(l_sc[...], approx=True)            # (H, tq)
        o = acc_sc[...] * inv_l[..., None]                       # (H, tq, hd) f32
        tq = o.shape[1]
        o = jnp.transpose(o, (1, 0, 2)).reshape(tq, -1)          # (tq, D)

        attn = jnp.dot(o.astype(wo_ref.dtype), wo_ref[...],
                       preferred_element_type=jnp.float32) + bo_ref[...]

        mod = mod_ref[0]                                         # (6, D)
        gate_msa, shift_mlp = mod[2:3, :], mod[3:4, :]
        scale_mlp, gate_mlp = mod[4:5, :], mod[5:6, :]

        # Residual 1 (attention branch) + norm2 + MLP modulation.
        res = x_ref[0].astype(jnp.float32) + gate_msa * attn
        nx2 = (_layernorm(res) * (1.0 + scale_mlp) + shift_mlp).astype(w1_ref.dtype)

        d_model = res.shape[-1]
        inner = w1_ref.shape[1]
        n_fc = inner // ff_chunk

        # FeedForward tiled over the 4D inner dimension: bounds the h1 live set.
        def ff_body(c, ff):
            c0 = pl.multiple_of(c * ff_chunk, ff_chunk)
            h1 = (jnp.dot(nx2, w1_ref[:, pl.ds(c0, ff_chunk)],
                          preferred_element_type=jnp.float32)
                  + b1_ref[:, pl.ds(c0, ff_chunk)])
            h1 = _gelu_tanh(h1).astype(w2_ref.dtype)
            return ff + jnp.dot(h1, w2_ref[pl.ds(c0, ff_chunk), :],
                                preferred_element_type=jnp.float32)

        ff = jax.lax.fori_loop(0, n_fc, ff_body,
                               jnp.zeros((tq, d_model), jnp.float32)) + b2_ref[...]

        # Residual 2 (MLP branch): single lane-dense store of the full tile.
        out_ref[...] = (res + gate_mlp * ff)[None].astype(out_ref.dtype)


# --------------------------------------------------------------------------- #
# Wrapper
# --------------------------------------------------------------------------- #
def sd3_single_transformer_block(x, temb, params, *, num_heads, head_dim,
                                 seq_tile=None, kv_tile=None,
                                 head_chunk=None, ff_chunk=None):
    B, S, D = x.shape
    assert num_heads * head_dim == D

    ts = seq_tile if seq_tile is not None else min(S, 256)
    tkv = kv_tile if kv_tile is not None else ts
    assert S % ts == 0 and S % tkv == 0
    assert (ts % 8 == 0 or ts == S) and (tkv % 8 == 0 or tkv == S)

    inner = params["w1"].shape[1]

    if head_chunk is None:
        head_chunk = min(num_heads, 8)
        while num_heads % head_chunk:
            head_chunk -= 1
    assert num_heads % head_chunk == 0

    if ff_chunk is None:
        ff_chunk = inner
        for cand in (1024, 512, 2048):
            if inner % cand == 0:
                ff_chunk = cand
                break
    assert inner % ff_chunk == 0

    vmem_limit = _vmem_limit_bytes()

    # AdaLayerNormZero modulation: tiny (B,D)@(D,6D) matmul done in plain XLA so
    # the 6*D^2 AdaLN weight never enters VMEM. Rows: shift_msa, scale_msa,
    # gate_msa, shift_mlp, scale_mlp, gate_mlp.
    silu = temb * jax.nn.sigmoid(temb)
    mod = (silu @ params["w_ada"] + params["b_ada"]).reshape(B, 6, D)
    mod = mod.astype(jnp.float32)

    def const_spec(shape):
        # Constant-index weights/biases: single-buffered — the DMA happens once,
        # and Buffered(1) avoids reserving a useless second pipeline buffer.
        nd = len(shape)
        return pl.BlockSpec(shape, lambda *idx: (0,) * nd,
                            pipeline_mode=pl.Buffered(1))

    # ------------------ Kernel 1: modulated LN + fused QKV ------------------
    qkv_struct = jax.ShapeDtypeStruct((B, num_heads, S, head_dim), jnp.bfloat16)
    head_out_spec = pl.BlockSpec((1, num_heads, ts, head_dim),
                                 lambda b, i: (b, 0, i, 0))
    q, k, v = pl.pallas_call(
        partial(_qkv_kernel, num_heads, head_dim, 1.0 / math.sqrt(head_dim)),
        out_shape=(qkv_struct, qkv_struct, qkv_struct),
        grid_spec=pltpu.PrefetchScalarGridSpec(
            num_scalar_prefetch=0,
            grid=(B, S // ts),
            in_specs=[
                pl.BlockSpec((1, 6, D), lambda b, i: (b, 0, 0)),    # modulation
                pl.BlockSpec((1, ts, D), lambda b, i: (b, i, 0)),   # x tile
                const_spec((D, 3 * D)), const_spec((1, 3 * D)),     # wqkv, bqkv
            ],
            out_specs=[head_out_spec, head_out_spec, head_out_spec],
        ),
        compiler_params=pltpu.CompilerParams(
            dimension_semantics=("parallel", "parallel"),
            vmem_limit_bytes=vmem_limit),
    )(mod, x, params["wqkv"], params["bqkv"])

    # ---- Kernel 2: flash attention + out-proj + norm2 + FFN + residuals ----
    out = pl.pallas_call(
        partial(_attn_ffn_kernel, head_chunk, ff_chunk),
        out_shape=jax.ShapeDtypeStruct((B, S, D), x.dtype),
        grid_spec=pltpu.PrefetchScalarGridSpec(
            num_scalar_prefetch=0,
            grid=(B, S // ts, S // tkv),
            in_specs=[
                pl.BlockSpec((1, 6, D), lambda b, i, j: (b, 0, 0)),
                pl.BlockSpec((1, ts, D), lambda b, i, j: (b, i, 0)),
                pl.BlockSpec((1, num_heads, ts, head_dim),
                             lambda b, i, j: (b, 0, i, 0)),
                pl.BlockSpec((1, num_heads, tkv, head_dim),
                             lambda b, i, j: (b, 0, j, 0)),
                pl.BlockSpec((1, num_heads, tkv, head_dim),
                             lambda b, i, j: (b, 0, j, 0)),
                const_spec((D, D)), const_spec((1, D)),             # wo, bo
                const_spec((D, inner)), const_spec((1, inner)),     # w1, b1
                const_spec((inner, D)), const_spec((1, D)),         # w2, b2
            ],
            out_specs=pl.BlockSpec((1, ts, D), lambda b, i, j: (b, i, 0)),
            scratch_shapes=[
                pltpu.VMEM((num_heads, ts), jnp.float32),            # running max
                pltpu.VMEM((num_heads, ts), jnp.float32),            # running sum
                pltpu.VMEM((num_heads, ts, head_dim), jnp.float32),  # acc
            ],
        ),
        compiler_params=pltpu.CompilerParams(
            dimension_semantics=("parallel", "parallel", "arbitrary"),
            vmem_limit_bytes=vmem_limit),
    )(mod, x, q, k, v, params["wo"], params["bo"],
      params["w1"], params["b1"], params["w2"], params["b2"])
    return out


# --------------------------------------------------------------------------- #
# Parameters & pure-JAX reference
# --------------------------------------------------------------------------- #
def make_params(key, dim, *, mlp_ratio=4):
    ks = jax.random.split(key, 12)
    bf = jnp.bfloat16

    def w(k, shape, s=0.02, dtype=jnp.float32):
        return (s * jax.random.normal(k, shape)).astype(dtype)

    inner = mlp_ratio * dim
    return {
        # AdaLN weight stays f32: applied outside the Pallas kernels.
        "w_ada": w(ks[0], (dim, 6 * dim)), "b_ada": w(ks[1], (1, 6 * dim), 0.01),
        # Fused QKV projection (one MXU launch); matmul weights bf16, biases f32.
        "wqkv": w(ks[2], (dim, 3 * dim), dtype=bf), "bqkv": w(ks[3], (1, 3 * dim), 0.01),
        "wo": w(ks[4], (dim, dim), dtype=bf), "bo": w(ks[5], (1, dim), 0.01),
        "w1": w(ks[6], (dim, inner), dtype=bf), "b1": w(ks[7], (1, inner), 0.01),
        "w2": w(ks[8], (inner, dim), dtype=bf), "b2": w(ks[9], (1, dim), 0.01),
    }


def reference(x, temb, p, *, num_heads, head_dim):
    B, S, D = x.shape
    f32 = lambda t: t.astype(jnp.float32)
    silu = temb * jax.nn.sigmoid(temb)
    emb = silu @ p["w_ada"] + p["b_ada"]
    shift_msa, scale_msa, gate_msa, shift_mlp, scale_mlp, gate_mlp = jnp.split(emb, 6, axis=-1)
    nx = _layernorm(x) * (1 + scale_msa[:, None]) + shift_msa[:, None]
    qkv = nx @ f32(p["wqkv"]) + p["bqkv"]
    q, k, v = qkv[..., :D], qkv[..., D:2 * D], qkv[..., 2 * D:]
    hd = lambda t: t.reshape(B, S, num_heads, head_dim).transpose(0, 2, 1, 3)
    qh, kh, vh = hd(q), hd(k), hd(v)
    s = jnp.einsum("bhqd,bhkd->bhqk", qh, kh) / math.sqrt(head_dim)
    pw = jax.nn.softmax(s, axis=-1)
    o = jnp.einsum("bhqk,bhkd->bhqd", pw, vh).transpose(0, 2, 1, 3).reshape(B, S, D)
    attn = o @ f32(p["wo"]) + p["bo"]
    x = x + gate_msa[:, None] * attn
    nx2 = _layernorm(x) * (1 + scale_mlp[:, None]) + shift_mlp[:, None]
    h = _gelu_tanh(nx2 @ f32(p["w1"]) + p["b1"])
    ff = h @ f32(p["w2"]) + p["b2"]
    return x + gate_mlp[:, None] * ff


if __name__ == "__main__":
    B, S, dim = 2, 16, 128
    num_heads, head_dim = 2, 64   # num_heads * head_dim == dim

    key = jax.random.PRNGKey(0)
    kx, kt, kp = jax.random.split(key, 3)
    x = jax.random.normal(kx, (B, S, dim), dtype=jnp.float32)
    temb = jax.random.normal(kt, (B, dim), dtype=jnp.float32)
    params = make_params(kp, dim)

    out = sd3_single_transformer_block(x, temb, params,
                                       num_heads=num_heads, head_dim=head_dim,
                                       seq_tile=8, kv_tile=8)
    out = jax.block_until_ready(out)

    ref = reference(x, temb, params, num_heads=num_heads, head_dim=head_dim)
    assert out.shape == (B, S, dim)
    err = float(jnp.max(jnp.abs(out - ref)))
    assert jnp.allclose(out, ref, atol=5e-3, rtol=5e-3), f"mismatch vs reference (max abs err {err})"

    print("KERNEL_OK")
</pallas_src>

<mosaic_0001>
module attributes {stable_mosaic.version = 11 : i64} {
  func.func @_qkv_kernel(%arg0: i32, %arg1: i32, %arg2: memref<1x6x128xf32, #tpu.memory_space<vmem>>, %arg3: memref<1x8x128xf32, #tpu.memory_space<vmem>>, %arg4: memref<128x384xbf16, #tpu.memory_space<vmem>>, %arg5: memref<1x384xf32, #tpu.memory_space<vmem>>, %arg6: memref<1x2x8x64xbf16, #tpu.memory_space<vmem>>, %arg7: memref<1x2x8x64xbf16, #tpu.memory_space<vmem>>, %arg8: memref<1x2x8x64xbf16, #tpu.memory_space<vmem>>) attributes {dimension_semantics = [#tpu.dimension_semantics<parallel>, #tpu.dimension_semantics<parallel>], iteration_bounds = array<i64: 2, 2>, scalar_prefetch = 0 : i64, scratch_operands = 0 : i64, tpu.core_type = #tpu.core_type<tc>, window_params = [{transform_indices = @transform_0, window_bounds = array<i64: 1, 6, 128>}, {transform_indices = @transform_1, window_bounds = array<i64: 1, 8, 128>}, {pipeline_mode = #tpu.pipeline_mode<synchronous>, transform_indices = @transform_2, window_bounds = array<i64: 128, 384>}, {pipeline_mode = #tpu.pipeline_mode<synchronous>, transform_indices = @transform_3, window_bounds = array<i64: 1, 384>}, {transform_indices = @transform_4, window_bounds = array<i64: 1, 2, 8, 64>}, {transform_indices = @transform_5, window_bounds = array<i64: 1, 2, 8, 64>}, {transform_indices = @transform_6, window_bounds = array<i64: 1, 2, 8, 64>}]} {
    %c0 = arith.constant 0 : index
    %c0_0 = arith.constant 0 : index
    %c0_1 = arith.constant 0 : index
    %0 = vector.load %arg3[%c0, %c0_0, %c0_1] : memref<1x8x128xf32, #tpu.memory_space<vmem>>, vector<1x8x128xf32>
    %1 = vector.shape_cast %0 : vector<1x8x128xf32> to vector<8x128xf32>
    %c0_2 = arith.constant 0 : index
    %c0_3 = arith.constant 0 : index
    %c0_4 = arith.constant 0 : index
    %2 = vector.load %arg2[%c0_2, %c0_3, %c0_4] : memref<1x6x128xf32, #tpu.memory_space<vmem>>, vector<1x6x128xf32>
    %3 = vector.shape_cast %2 : vector<1x6x128xf32> to vector<6x128xf32>
    %4 = vector.extract_strided_slice %3 {offsets = [0, 0], sizes = [1, 128], strides = [1, 1]} : vector<6x128xf32> to vector<1x128xf32>
    %5 = vector.extract_strided_slice %3 {offsets = [1, 0], sizes = [1, 128], strides = [1, 1]} : vector<6x128xf32> to vector<1x128xf32>
    %cst = arith.constant dense<0.000000e+00> : vector<8xf32>
    %6 = vector.multi_reduction <add>, %1, %cst [1] : vector<8x128xf32> to vector<8xf32>
    %7 = vector.shape_cast %6 : vector<8xf32> to vector<8x1xf32>
    %cst_5 = arith.constant 1.280000e+02 : f32
    %8 = vector.broadcast %cst_5 : f32 to vector<8x1xf32>
    %9 = arith.divf %7, %8 : vector<8x1xf32>
    %10 = vector.broadcast %9 : vector<8x1xf32> to vector<8x128xf32>
    %11 = arith.subf %1, %10 : vector<8x128xf32>
    %12 = arith.mulf %11, %11 : vector<8x128xf32>
    %cst_6 = arith.constant dense<0.000000e+00> : vector<8xf32>
    %13 = vector.multi_reduction <add>, %12, %cst_6 [1] : vector<8x128xf32> to vector<8xf32>
    %14 = vector.shape_cast %13 : vector<8xf32> to vector<8x1xf32>
    %cst_7 = arith.constant 1.280000e+02 : f32
    %15 = vector.broadcast %cst_7 : f32 to vector<8x1xf32>
    %16 = arith.divf %14, %15 : vector<8x1xf32>
    %17 = vector.broadcast %9 : vector<8x1xf32> to vector<8x128xf32>
    %18 = arith.subf %1, %17 : vector<8x128xf32>
    %cst_8 = arith.constant 9.99999997E-7 : f32
    %19 = vector.broadcast %cst_8 : f32 to vector<8x1xf32>
    %20 = arith.addf %16, %19 : vector<8x1xf32>
    %21 = math.rsqrt %20 : vector<8x1xf32>
    %22 = vector.broadcast %21 : vector<8x1xf32> to vector<8x128xf32>
    %23 = arith.mulf %18, %22 : vector<8x128xf32>
    %cst_9 = arith.constant 1.000000e+00 : f32
    %24 = vector.broadcast %cst_9 : f32 to vector<1x128xf32>
    %25 = arith.addf %24, %5 : vector<1x128xf32>
    %26 = vector.broadcast %25 : vector<1x128xf32> to vector<8x128xf32>
    %27 = arith.mulf %23, %26 : vector<8x128xf32>
    %28 = vector.broadcast %4 : vector<1x128xf32> to vector<8x128xf32>
    %29 = arith.addf %27, %28 : vector<8x128xf32>
    %30 = arith.truncf %29 : vector<8x128xf32> to vector<8x128xbf16>
    %c0_10 = arith.constant 0 : index
    %c0_11 = arith.constant 0 : index
    %31 = vector.load %arg4[%c0_10, %c0_11] : memref<128x384xbf16, #tpu.memory_space<vmem>>, vector<128x384xbf16>
    %cst_12 = arith.constant dense<0.000000e+00> : vector<8x384xf32>
    %32 = tpu.matmul %30, %31, %cst_12 {dimension_numbers = #tpu.dot_dimension_numbers<[1], [0], [0], [1], [0, 0, 1, 1], [], []>} : vector<8x128xbf16>, vector<128x384xbf16>, vector<8x384xf32> -> vector<8x384xf32>
    %c0_13 = arith.constant 0 : index
    %c0_14 = arith.constant 0 : index
    %33 = vector.load %arg5[%c0_13, %c0_14] : memref<1x384xf32, #tpu.memory_space<vmem>>, vector<1x384xf32>
    %34 = vector.broadcast %33 : vector<1x384xf32> to vector<8x384xf32>
    %35 = arith.addf %32, %34 : vector<8x384xf32>
    %36 = vector.extract_strided_slice %35 {offsets = [0, 0], sizes = [8, 128], strides = [1, 1]} : vector<8x384xf32> to vector<8x128xf32>
    %cst_15 = arith.constant 1.250000e-01 : f32
    %37 = vector.broadcast %cst_15 : f32 to vector<8x128xf32>
    %38 = arith.mulf %36, %37 : vector<8x128xf32>
    %39 = vector.extract_strided_slice %35 {offsets = [0, 128], sizes = [8, 128], strides = [1, 1]} : vector<8x384xf32> to vector<8x128xf32>
    %40 = vector.extract_strided_slice %35 {offsets = [0, 256], sizes = [8, 128], strides = [1, 1]} : vector<8x384xf32> to vector<8x128xf32>
    %41 = vector.shape_cast %38 : vector<8x128xf32> to vector<8x2x64xf32>
    %42 = tpu.transpose %41, [1, 0, 2] : vector<8x2x64xf32> -> vector<2x8x64xf32>
    %43 = arith.truncf %42 : vector<2x8x64xf32> to vector<2x8x64xbf16>
    %44 = vector.shape_cast %43 : vector<2x8x64xbf16> to vector<1x2x8x64xbf16>
    %c0_16 = arith.constant 0 : index
    %c0_17 = arith.constant 0 : index
    %c0_18 = arith.constant 0 : index
    %c0_19 = arith.constant 0 : index
    %45 = vector.load %arg6[%c0_16, %c0_17, %c0_18, %c0_19] : memref<1x2x8x64xbf16, #tpu.memory_space<vmem>>, vector<1x2x8x64xbf16>
    tpu.vector_store %arg6[%c0_16, %c0_17, %c0_18, %c0_19], %44 {strides = array<i32>} : memref<1x2x8x64xbf16, #tpu.memory_space<vmem>>, vector<1x2x8x64xbf16>,
    %46 = vector.shape_cast %39 : vector<8x128xf32> to vector<8x2x64xf32>
    %47 = tpu.transpose %46, [1, 0, 2] : vector<8x2x64xf32> -> vector<2x8x64xf32>
    %48 = arith.truncf %47 : vector<2x8x64xf32> to vector<2x8x64xbf16>
    %49 = vector.shape_cast %48 : vector<2x8x64xbf16> to vector<1x2x8x64xbf16>
    %c0_20 = arith.constant 0 : index
    %c0_21 = arith.constant 0 : index
    %c0_22 = arith.constant 0 : index
    %c0_23 = arith.constant 0 : index
    %50 = vector.load %arg7[%c0_20, %c0_21, %c0_22, %c0_23] : memref<1x2x8x64xbf16, #tpu.memory_space<vmem>>, vector<1x2x8x64xbf16>
    tpu.vector_store %arg7[%c0_20, %c0_21, %c0_22, %c0_23], %49 {strides = array<i32>} : memref<1x2x8x64xbf16, #tpu.memory_space<vmem>>, vector<1x2x8x64xbf16>,
    %51 = vector.shape_cast %40 : vector<8x128xf32> to vector<8x2x64xf32>
    %52 = tpu.transpose %51, [1, 0, 2] : vector<8x2x64xf32> -> vector<2x8x64xf32>
    %53 = arith.truncf %52 : vector<2x8x64xf32> to vector<2x8x64xbf16>
    %54 = vector.shape_cast %53 : vector<2x8x64xbf16> to vector<1x2x8x64xbf16>
    %c0_24 = arith.constant 0 : index
    %c0_25 = arith.constant 0 : index
    %c0_26 = arith.constant 0 : index
    %c0_27 = arith.constant 0 : index
    %55 = vector.load %arg8[%c0_24, %c0_25, %c0_26, %c0_27] : memref<1x2x8x64xbf16, #tpu.memory_space<vmem>>, vector<1x2x8x64xbf16>
    tpu.vector_store %arg8[%c0_24, %c0_25, %c0_26, %c0_27], %54 {strides = array<i32>} : memref<1x2x8x64xbf16, #tpu.memory_space<vmem>>, vector<1x2x8x64xbf16>,
    return
  }
  func.func @transform_0(%arg0: i32, %arg1: i32) -> (i32, i32, i32) {
    %c0_i32 = arith.constant 0 : i32
    %c0_i32_0 = arith.constant 0 : i32
    %c0_i32_1 = arith.constant 0 : i32
    return %arg0, %c0_i32, %c0_i32_0 : i32, i32, i32
  }
  func.func @transform_1(%arg0: i32, %arg1: i32) -> (i32, i32, i32) {
    %c0_i32 = arith.constant 0 : i32
    %c0_i32_0 = arith.constant 0 : i32
    return %arg0, %arg1, %c0_i32 : i32, i32, i32
  }
  func.func @transform_2(%arg0: i32, %arg1: i32) -> (i32, i32) {
    %c0_i32 = arith.constant 0 : i32
    %c0_i32_0 = arith.constant 0 : i32
    %c0_i32_1 = arith.constant 0 : i32
    return %c0_i32, %c0_i32_0 : i32, i32
  }
  func.func @transform_3(%arg0: i32, %arg1: i32) -> (i32, i32) {
    %c0_i32 = arith.constant 0 : i32
    %c0_i32_0 = arith.constant 0 : i32
    %c0_i32_1 = arith.constant 0 : i32
    return %c0_i32, %c0_i32_0 : i32, i32
  }
  func.func @transform_4(%arg0: i32, %arg1: i32) -> (i32, i32, i32, i32) {
    %c0_i32 = arith.constant 0 : i32
    %c0_i32_0 = arith.constant 0 : i32
    %c0_i32_1 = arith.constant 0 : i32
    return %arg0, %c0_i32, %arg1, %c0_i32_0 : i32, i32, i32, i32
  }
  func.func @transform_5(%arg0: i32, %arg1: i32) -> (i32, i32, i32, i32) {
    %c0_i32 = arith.constant 0 : i32
    %c0_i32_0 = arith.constant 0 : i32
    %c0_i32_1 = arith.constant 0 : i32
    return %arg0, %c0_i32, %arg1, %c0_i32_0 : i32, i32, i32, i32
  }
  func.func @transform_6(%arg0: i32, %arg1: i32) -> (i32, i32, i32, i32) {
    %c0_i32 = arith.constant 0 : i32
    %c0_i32_0 = arith.constant 0 : i32
    %c0_i32_1 = arith.constant 0 : i32
    return %arg0, %c0_i32, %arg1, %c0_i32_0 : i32, i32, i32, i32
  }
}

</mosaic_0001>

<llo_original>
// kernel: tpu_custom_call.1
$region0: #{tpu_custom_call.1}
  #allocation0 [shape = 'u32[]', space=smem, size = 0x4, offset = 0x4, fixed_abs, tag = 'smem constant byte address 0x4 - core index']
  #allocation1 [shape = 'u32[144,128]{1,0:T(1,128)}', space=vmem, size = 0x12000, scoped, tag = 'internal scratch']
  %s0 = inlined_call_operand.vmem [shape: f32[2,6,128], index: 0, kind: input, shape index: {}]
  %s1 = inlined_call_operand.hbm [shape: f32[2,16,128], index: 1, kind: input, shape index: {}]
  %s2 = inlined_call_operand.hbm [shape: bf16[128,384], index: 2, kind: input, shape index: {}]
  %s3 = inlined_call_operand.vmem [shape: f32[1,384], index: 3, kind: input, shape index: {}]
  %s4 = inlined_call_operand.hbm [shape: bf16[2,2,16,64], index: 4, kind: output, shape index: {0}]
  %s5 = inlined_call_operand.hbm [shape: bf16[2,2,16,64], index: 5, kind: output, shape index: {1}]
  %s6 = inlined_call_operand.hbm [shape: bf16[2,2,16,64], index: 6, kind: output, shape index: {2}]
  %7 = xla_tuple %s4, %s5, %s6
  %s8 = sld [smem:[#allocation0]]
  $region73: #{tpu_custom_call.1} parent=0
    _
  %s10 = ssub.s32 1, %s8
  %s11 = scalar_select 0, %s10, %s8
  $region1: #{tpu_custom_call.1} parent=0
    #allocation2 [shape = 'u8[8192]{0}', space=vmem, size = 0x2000, scoped, tag = 'input window, operand 1']
    #allocation3 [shape = 's32[2]{0}', space=sflag, size = 0x8, scoped, tag = 'scoped memory for tpu_custom_call.1']
    #allocation4 [shape = 's32[2]{0}', space=sflag, size = 0x8, scoped, tag = 'scoped memory for tpu_custom_call.1']
    #allocation5 [shape = 'u8[98304]{0}', space=vmem, size = 0x18000, scoped, tag = 'input window, operand 2, single buffered']
    #allocation6 [shape = 's32[1]{0}', space=sflag, size = 0x4, scoped, tag = 'scoped memory for tpu_custom_call.1']
    #allocation7 [shape = 'u8[8192]{0}', space=vmem, size = 0x2000, scoped, tag = 'output window, operand 0']
    #allocation8 [shape = 'u8[8192]{0}', space=vmem, size = 0x2000, scoped, tag = 'output window, operand 1']
    #allocation9 [shape = 's32[2]{0}', space=sflag, size = 0x8, scoped, tag = 'scoped memory for tpu_custom_call.1']
    #allocation10 [shape = 'u8[8192]{0}', space=vmem, size = 0x2000, scoped, tag = 'output window, operand 2']
    %12 = vsyncpa [#allocation3], 0
    %s13 = scalar_lea.sflag [#allocation3], 1
    %14 = vsyncpa %s13, 0
    %15 = vsyncpa [#allocation6], 0
    %16 = vsyncpa [#allocation4], 0
    %s17 = scalar_lea.sflag [#allocation4], 1
    %18 = vsyncpa %s17, 0
    %19 = vsyncpa [#allocation9], 0
    %s20 = scalar_lea.sflag [#allocation9], 1
    %21 = vsyncpa %s20, 0
    loop: start=0, step=1, limit=6
    $region2: #{tpu_custom_call.1} parent=1 // loop_pre_header
      _
    $region3: #{tpu_custom_call.1} parent=1 // loop_header
      %s23 = sphi 0, %s27
      %p24 = scmp.ge.s32.totalorder %s23, 6
      %s30 = sphi 0, %s42
      %s31 = sphi 0, %s38
      %s32 = sphi 0, %s30
      %s33 = sphi 0, %s31
      %s34 = sphi 0, %s32
      %s35 = sphi 0, %s33
      %s45 = sphi 0, %s47
      %s48 = sphi 0, %s45
      %s49 = sphi 0, %s48
      %s65 = sphi 0, %s49
      %s73 = sphi 0, %s75
      %s76 = sphi 0, %s73
      %s77 = sphi 0, %s76
      %s93 = sphi 0, %s77
      %s97 = sphi 0, %s97
      %s99 = sphi 0, %s97
      %s100 = sphi 0, %s99
      %s114 = sphi 0, %s100
      %s118 = sphi 0, %s118
      %s120 = sphi 0, %s118
      %s121 = sphi 0, %s120
      %s135 = sphi 0, %s121
      %s143 = sphi 0, %s145
      %s146 = sphi 0, %s143
      %s147 = sphi 0, %s146
      %s163 = sphi 0, %s147
      %s171 = sphi 0, %s173
      %s174 = sphi 0, %s171
      %s175 = sphi 0, %s174
      %s191 = sphi 0, %s175
      %s199 = sphi 0, %s201
      %s202 = sphi 0, %s199
      %s203 = sphi 0, %s202
      %s219 = sphi 0, %s203
    $region4: #{tpu_custom_call.1} parent=1 // loop_header_branch
      %26 = sbr.rel (%p24) target = $region8
    $region5: #{tpu_custom_call.1} parent=1 // loop_body
      %s28 = ssub.s32 %s23, 1
      %s29 = ssub.s32 %s23, 2
      %s36 = sadd.s32 1, %s31
      %p37 = scmp.ge.s32.totalorder %s36, 2
      %s38 = scalar_select %p37, 0, %s36
      %s39 = sadd.s32 1, %s30
      %s40 = scalar_select %p37, %s39, %s30
      %p41 = scmp.ge.s32.totalorder %s40, 2
      %s42 = scalar_select %p41, 0, %s40
      %s43 = ssub.s32 %s30, %s42
      %p44 = scmp.eq.s32.totalorder %s43, 0
      %s46 = sadd.s32 %s45, 1
      %s47 = scalar_select %p44, %s45, %s46
      %p50 = pneg %p44
      %p51 = scmp.eq.s32.totalorder %s23, 3
      %p52 = por %p50, %p51
      %p53 = scmp.ne.s32.totalorder %s45, %s48
      %p54 = scmp.eq.s32.totalorder %s23, 0
      %p55 = por %p53, %p54
      %p56 = scmp.ne.s32.totalorder %s45, %s48
      %p57 = scmp.eq.s32.totalorder %s28, 3
      %p58 = por %p56, %p57
      %p59 = scmp.ne.s32.totalorder %s48, %s49
      %p60 = scmp.eq.s32.totalorder %s28, 0
      %p61 = por %p59, %p60
      %p62 = scmp.ne.s32.totalorder %s48, %s49
      %p63 = scmp.eq.s32.totalorder %s29, 3
      %p64 = por %p62, %p63
      %p66 = scmp.ne.s32.totalorder %s49, %s65
      %p67 = scmp.eq.s32.totalorder %s29, 0
      %p68 = por %p66, %p67
      %s69 = ssub.s32 %s30, %s42
      %s70 = ssub.s32 %s31, %s38
      %s71 = sor.u32 %s69, %s70
      %p72 = scmp.eq.s32.totalorder %s71, 0
      %s74 = sadd.s32 %s73, 1
      %s75 = scalar_select %p72, %s73, %s74
      %p78 = pneg %p72
      %p79 = scmp.eq.s32.totalorder %s23, 3
      %p80 = por %p78, %p79
      %p81 = scmp.ne.s32.totalorder %s73, %s76
      %p82 = scmp.eq.s32.totalorder %s23, 0
      %p83 = por %p81, %p82
      %p84 = scmp.ne.s32.totalorder %s73, %s76
      %p85 = scmp.eq.s32.totalorder %s28, 3
      %p86 = por %p84, %p85
      %p87 = scmp.ne.s32.totalorder %s76, %s77
      %p88 = scmp.eq.s32.totalorder %s28, 0
      %p89 = por %p87, %p88
      %p90 = scmp.ne.s32.totalorder %s76, %s77
      %p91 = scmp.eq.s32.totalorder %s29, 3
      %p92 = por %p90, %p91
      %p94 = scmp.ne.s32.totalorder %s77, %s93
      %p95 = scmp.eq.s32.totalorder %s29, 0
      %p96 = por %p94, %p95
      %s98 = sadd.s32 %s97, 1
      %p101 = scmp.eq.s32.totalorder %s23, 3
      %p102 = scmp.ne.s32.totalorder %s97, %s99
      %p103 = scmp.eq.s32.totalorder %s23, 0
      %p104 = por %p102, %p103
      %p105 = scmp.ne.s32.totalorder %s97, %s99
      %p106 = scmp.eq.s32.totalorder %s28, 3
      %p107 = por %p105, %p106
      %p108 = scmp.ne.s32.totalorder %s99, %s100
      %p109 = scmp.eq.s32.totalorder %s28, 0
      %p110 = por %p108, %p109
      %p111 = scmp.ne.s32.totalorder %s99, %s100
      %p112 = scmp.eq.s32.totalorder %s29, 3
      %p113 = por %p111, %p112
      %p115 = scmp.ne.s32.totalorder %s100, %s114
      %p116 = scmp.eq.s32.totalorder %s29, 0
      %p117 = por %p115, %p116
      %s119 = sadd.s32 %s118, 1
      %p122 = scmp.eq.s32.totalorder %s23, 3
      %p123 = scmp.ne.s32.totalorder %s118, %s120
      %p124 = scmp.eq.s32.totalorder %s23, 0
      %p125 = por %p123, %p124
      %p126 = scmp.ne.s32.totalorder %s118, %s120
      %p127 = scmp.eq.s32.totalorder %s28, 3
      %p128 = por %p126, %p127
      %p129 = scmp.ne.s32.totalorder %s120, %s121
      %p130 = scmp.eq.s32.totalorder %s28, 0
      %p131 = por %p129, %p130
      %p132 = scmp.ne.s32.totalorder %s120, %s121
      %p133 = scmp.eq.s32.totalorder %s29, 3
      %p134 = por %p132, %p133
      %p136 = scmp.ne.s32.totalorder %s121, %s135
      %p137 = scmp.eq.s32.totalorder %s29, 0
      %p138 = por %p136, %p137
      %s139 = ssub.s32 %s30, %s42
      %s140 = ssub.s32 %s31, %s38
      %s141 = sor.u32 %s139, %s140
      %p142 = scmp.eq.s32.totalorder %s141, 0
      %s144 = sadd.s32 %s143, 1
      %s145 = scalar_select %p142, %s143, %s144
      %p148 = pneg %p142
      %p149 = scmp.eq.s32.totalorder %s23, 3
      %p150 = por %p148, %p149
      %p151 = scmp.ne.s32.totalorder %s143, %s146
      %p152 = scmp.eq.s32.totalorder %s23, 0
      %p153 = por %p151, %p152
      %p154 = scmp.ne.s32.totalorder %s143, %s146
      %p155 = scmp.eq.s32.totalorder %s28, 3
      %p156 = por %p154, %p155
      %p157 = scmp.ne.s32.totalorder %s146, %s147
      %p158 = scmp.eq.s32.totalorder %s28, 0
      %p159 = por %p157, %p158
      %p160 = scmp.ne.s32.totalorder %s146, %s147
      %p161 = scmp.eq.s32.totalorder %s29, 3
      %p162 = por %p160, %p161
      %p164 = scmp.ne.s32.totalorder %s147, %s163
      %p165 = scmp.eq.s32.totalorder %s29, 0
      %p166 = por %p164, %p165
      %s167 = ssub.s32 %s30, %s42
      %s168 = ssub.s32 %s31, %s38
      %s169 = sor.u32 %s167, %s168
      %p170 = scmp.eq.s32.totalorder %s169, 0
      %s172 = sadd.s32 %s171, 1
      %s173 = scalar_select %p170, %s171, %s172
      %p176 = pneg %p170
      %p177 = scmp.eq.s32.totalorder %s23, 3
      %p178 = por %p176, %p177
      %p179 = scmp.ne.s32.totalorder %s171, %s174
      %p180 = scmp.eq.s32.totalorder %s23, 0
      %p181 = por %p179, %p180
      %p182 = scmp.ne.s32.totalorder %s171, %s174
      %p183 = scmp.eq.s32.totalorder %s28, 3
      %p184 = por %p182, %p183
      %p185 = scmp.ne.s32.totalorder %s174, %s175
      %p186 = scmp.eq.s32.totalorder %s28, 0
      %p187 = por %p185, %p186
      %p188 = scmp.ne.s32.totalorder %s174, %s175
      %p189 = scmp.eq.s32.totalorder %s29, 3
      %p190 = por %p188, %p189
      %p192 = scmp.ne.s32.totalorder %s175, %s191
      %p193 = scmp.eq.s32.totalorder %s29, 0
      %p194 = por %p192, %p193
      %s195 = ssub.s32 %s30, %s42
      %s196 = ssub.s32 %s31, %s38
      %s197 = sor.u32 %s195, %s196
      %p198 = scmp.eq.s32.totalorder %s197, 0
      %s200 = sadd.s32 %s199, 1
      %s201 = scalar_select %p198, %s199, %s200
      %p204 = pneg %p198
      %p205 = scmp.eq.s32.totalorder %s23, 3
      %p206 = por %p204, %p205
      %p207 = scmp.ne.s32.totalorder %s199, %s202
      %p208 = scmp.eq.s32.totalorder %s23, 0
      %p209 = por %p207, %p208
      %p210 = scmp.ne.s32.totalorder %s199, %s202
      %p211 = scmp.eq.s32.totalorder %s28, 3
      %p212 = por %p210, %p211
      %p213 = scmp.ne.s32.totalorder %s202, %s203
      %p214 = scmp.eq.s32.totalorder %s28, 0
      %p215 = por %p213, %p214
      %p216 = scmp.ne.s32.totalorder %s202, %s203
      %p217 = scmp.eq.s32.totalorder %s29, 3
      %p218 = por %p216, %p217
      %p220 = scmp.ne.s32.totalorder %s203, %s219
      %p221 = scmp.eq.s32.totalorder %s29, 0
      %p222 = por %p220, %p221
      %p223 = scmp.le.s32.totalorder 1, %s23
      %p224 = scmp.lt.s32.totalorder %s23, 5
      %p225 = pnand %p223, %p224
      %p226 = pneg %p225
      // Predicated region
      $region9: #{tpu_custom_call.1} parent=5 // pred_check
        _
      $region10: #{tpu_custom_call.1} parent=5 // pred_check_branch
        %228 = sbr.rel (%p225) target = $region12
      $region11: #{tpu_custom_call.1} parent=5 // pred_region
        %s229 = ssub.s32 %s23, 1
        // Predicated region
        $region13: #{tpu_custom_call.1} parent=11 // pred_check
          %p230 = pneg %p110
        $region14: #{tpu_custom_call.1} parent=11 // pred_check_branch
          %232 = sbr.rel (%p230) target = $region16
        $region15: #{tpu_custom_call.1} parent=11 // pred_region
          %s234 = ssub.s32 3072, 3072
          %235 = vsyncadd [#allocation6], %s234
          %s236 = sshll.u32 [#allocation5], 4
          %s237 = int_to_ptr.vmem [resolvable:$true] %s236
          %242 = dma.hbm_to_vmem [thread:$0]  %s2, 3072, %s237, [#allocation6], 192, 192, 12
        $region16: #{tpu_custom_call.1} parent=11 // pred_fallthru
          _
        // Predicated region
        $region17: #{tpu_custom_call.1} parent=11 // pred_check
          %p243 = pneg %p131
        $region18: #{tpu_custom_call.1} parent=11 // pred_check_branch
          %245 = sbr.rel (%p243) target = $region20
        $region19: #{tpu_custom_call.1} parent=11 // pred_region
          _
        $region20: #{tpu_custom_call.1} parent=11 // pred_fallthru
          _
      $region12: #{tpu_custom_call.1} parent=5 // pred_fallthru
        _
      %p246 = scmp.lt.s32.totalorder %s23, 4
      // Predicated region
      $region21: #{tpu_custom_call.1} parent=5 // pred_check
        %p247 = pneg %p246
      $region22: #{tpu_custom_call.1} parent=5 // pred_check_branch
        %249 = sbr.rel (%p247) target = $region24
      $region23: #{tpu_custom_call.1} parent=5 // pred_region
        // Predicated region
        $region25: #{tpu_custom_call.1} parent=23 // pred_check
          %p250 = pneg %p55
        $region26: #{tpu_custom_call.1} parent=23 // pred_check_branch
          %252 = sbr.rel (%p250) target = $region28
        $region27: #{tpu_custom_call.1} parent=23 // pred_region
          %p253 = scmp.lt.s32.totalorder %s30, 1
          %s254 = scalar_select %p253, %s30, 1
          %s255 = smul.addr %s254, 8
          %s256 = scalar_lea.vmem %s0, %s255
        $region28: #{tpu_custom_call.1} parent=23 // pred_fallthru
          _
        // Predicated region
        $region29: #{tpu_custom_call.1} parent=23 // pred_check
          %p257 = pneg %p83
        $region30: #{tpu_custom_call.1} parent=23 // pred_check_branch
          %259 = sbr.rel (%p257) target = $region32
        $region31: #{tpu_custom_call.1} parent=23 // pred_region
          %s260 = sand.u32 %s73, 1
          %s261 = scalar_lea.sflag [#allocation3], %s260
          %s262 = sand.u32 %s73, 1
          %s263 = smul.addr %s262, 8
          %s264 = scalar_lea.vmem [#allocation2], %s263
          %s266 = ssub.s32 128, 128
          %267 = vsyncadd %s261, %s266
          %s268 = smul.addr %s30, 2
          %s269 = sadd.s32 %s31, %s268
          %s270 = smul.addr %s269, 128
          %s271 = scalar_lea.hbm %s1, %s270
          %s273 = sshll.u32 %s264, 4
          %s274 = int_to_ptr.vmem [resolvable:$true] %s273
          %276 = dma.hbm_to_vmem [thread:$0]  %s271, 128, %s274, %s261
        $region32: #{tpu_custom_call.1} parent=23 // pred_fallthru
          _
      $region24: #{tpu_custom_call.1} parent=5 // pred_fallthru
        _
      %p277 = scmp.le.s32.totalorder 1, %s23
      %p278 = scmp.lt.s32.totalorder %s23, 5
      %p279 = pnand %p277, %p278
      %p280 = pneg %p279
      // Predicated region
      $region33: #{tpu_custom_call.1} parent=5 // pred_check
        _
      $region34: #{tpu_custom_call.1} parent=5 // pred_check_branch
        %282 = sbr.rel (%p279) target = $region36
      $region35: #{tpu_custom_call.1} parent=5 // pred_region
        %s283 = ssub.s32 %s23, 1
        %s284 = sand.u32 %s76, 1
        %s285 = scalar_lea.sflag [#allocation3], %s284
        %s286 = sand.u32 %s76, 1
        %s287 = smul.addr %s286, 8
        %s288 = scalar_lea.vmem [#allocation2], %s287
        // Predicated region
        $region37: #{tpu_custom_call.1} parent=35 // pred_check
          %p289 = pneg %p89
        $region38: #{tpu_custom_call.1} parent=35 // pred_check_branch
          %291 = sbr.rel (%p289) target = $region40
        $region39: #{tpu_custom_call.1} parent=35 // pred_region
          %292 = dma.done %s285, 128
        $region40: #{tpu_custom_call.1} parent=35 // pred_fallthru
          _
        // Predicated region
        $region41: #{tpu_custom_call.1} parent=35 // pred_check
          %p293 = pneg %p110
        $region42: #{tpu_custom_call.1} parent=35 // pred_check_branch
          %295 = sbr.rel (%p293) target = $region44
        $region43: #{tpu_custom_call.1} parent=35 // pred_region
          %296 = dma.done [#allocation6], 3072
        $region44: #{tpu_custom_call.1} parent=35 // pred_fallthru
          _
        %p297 = scmp.lt.s32.totalorder %s32, 1
        %s298 = scalar_select %p297, %s32, 1
        %s299 = smul.addr %s298, 8
        %s300 = scalar_lea.vmem %s0, %s299
        %p301 = pneg %p61
        %p302 = pneg %p58
        %s303 = sand.u32 %s76, 1
        %s304 = scalar_lea.sflag [#allocation3], %s303
        %s305 = sand.u32 %s76, 1
        %s306 = smul.addr %s305, 8
        %s307 = scalar_lea.vmem [#allocation2], %s306
        %p308 = pneg %p89
        %p309 = pneg %p86
        %p310 = pneg %p110
        %p311 = pneg %p107
        %p312 = pneg %p131
        %p313 = pneg %p128
        %p314 = pneg %p159
        %p315 = pneg %p156
        %s316 = sand.u32 %s146, 1
        %s317 = scalar_lea.sflag [#allocation4], %s316
        %s318 = sand.u32 %s146, 1
        %s319 = smul.addr %s318, 8
        %s320 = scalar_lea.vmem [#allocation7], %s319
        %p321 = pneg %p187
        %p322 = pneg %p184
        %s323 = sand.u32 %s28, 1
        %s324 = scalar_lea.sflag [#allocation9], %s323
        %s325 = sand.u32 %s174, 1
        %s326 = smul.addr %s325, 8
        %s327 = scalar_lea.vmem [#allocation8], %s326
        %p328 = pneg %p215
        %p329 = pneg %p212
        %s330 = sand.u32 %s28, 1
        %s331 = scalar_lea.sflag [#allocation9], %s330
        %s332 = sand.u32 %s202, 1
        %s333 = smul.addr %s332, 8
        %s334 = scalar_lea.vmem [#allocation10], %s333
        %p335 = scmp.lt.s32.totalorder %s32, 1
        %s336 = scalar_select %p335, %s32, 1
        %s337 = smul.addr %s336, 8
        %s338 = scalar_lea.vmem %s0, %s337
        %v340 = vld [vmem:[%s288] sm:$0xff]
        %v341 = vld [vmem:[%s338] sm:$0x3f]
        %342 = vadd.xlane.f32.xlu0 %v340
        %v343 = vpop.xlane.xlu0 %342
        %v344 = vrcp.pop 128.0
        %v345 = vmul.f32 %v343, %v344
        %v346 = vsub.f32 %v340, %v345
        %v347 = vmul.f32 %v346, %v346
        %348 = vadd.xlane.f32.xlu0 %v347
        %v349 = vpop.xlane.xlu0 %348
        %v350 = vmul.f32 %v349, %v344
        %v351 = vadd.f32 %v350, 1e-06
        %v352 = vrsqrt.pop %v351
        %v353 = vmul.f32 %v346, %v352
        %v354 = vadd.f32 %v341, 1.0
        %v355 = vlaneseq
        %v356 = vshrl.u32 %v355, 7
        %v357 = vsub.s32 1, %v356
        %v358 = vrot.slane %v354, %v357
        %v359 = vmul.f32 %v353, %v358
        %v360 = vlaneseq
        %v361 = vshrl.u32 %v360, 7
        %v362 = vsub.s32 0, %v361
        %v363 = vrot.slane %v341, %v362
        %v364 = vadd.f32 %v359, %v363
        %v365 = vpack.c.bf16 %v364, %v364
        %v366 = vld [vmem:[#allocation5] sm:$0xff]
        %v367 = vld [vmem:[#allocation5 + $0x8] sm:$0xf]
        %v368 = vld [vmem:[#allocation5 + $0xc] sm:$0xff]
        %v369 = vld [vmem:[#allocation5 + $0x14] sm:$0xf]
        %v370 = vld [vmem:[#allocation5 + $0x18] sm:$0xff]
        %v371 = vld [vmem:[#allocation5 + $0x20] sm:$0xf]
        %v372 = vld [vmem:[#allocation5 + $0x24] sm:$0xff]
        %v373 = vld [vmem:[#allocation5 + $0x2c] sm:$0xf]
        %v374 = vld [vmem:[#allocation5 + $0x30] sm:$0xff]
        %v375 = vld [vmem:[#allocation5 + $0x38] sm:$0xf]
        %v376 = vld [vmem:[#allocation5 + $0x3c] sm:$0xff]
        %v377 = vld [vmem:[#allocation5 + $0x44] sm:$0xf]
        %v378 = vld [vmem:[#allocation5 + $0x48] sm:$0xff]
        %v379 = vld [vmem:[#allocation5 + $0x50] sm:$0xf]
        %v380 = vld [vmem:[#allocation5 + $0x54] sm:$0xff]
        %v381 = vld [vmem:[#allocation5 + $0x5c] sm:$0xf]
        %v382 = vld [vmem:[#allocation5 + $0x60] sm:$0xff]
        %v383 = vld [vmem:[#allocation5 + $0x68] sm:$0xf]
        %v384 = vld [vmem:[#allocation5 + $0x6c] sm:$0xff]
        %v385 = vld [vmem:[#allocation5 + $0x74] sm:$0xf]
        %v386 = vld [vmem:[#allocation5 + $0x78] sm:$0xff]
        %v387 = vld [vmem:[#allocation5 + $0x80] sm:$0xf]
        %v388 = vld [vmem:[#allocation5 + $0x84] sm:$0xff]
        %v389 = vld [vmem:[#allocation5 + $0x8c] sm:$0xf]
        %v390 = vld [vmem:[#allocation5 + $0x90] sm:$0xff]
        %v391 = vld [vmem:[#allocation5 + $0x98] sm:$0xf]
        %v392 = vld [vmem:[#allocation5 + $0x9c] sm:$0xff]
        %v393 = vld [vmem:[#allocation5 + $0xa4] sm:$0xf]
        %v394 = vld [vmem:[#allocation5 + $0xa8] sm:$0xff]
        %v395 = vld [vmem:[#allocation5 + $0xb0] sm:$0xf]
        %v396 = vld [vmem:[#allocation5 + $0xb4] sm:$0xff]
        %v397 = vld [vmem:[#allocation5 + $0xbc] sm:$0xf]
        %v398 = vld [vmem:[%s3] sm:$0x7]
        %v400 = vlaneseq
        %v401 = vshrl.u32 %v400, 7
        %v402 = vsub.s32 0, %v401
        %v403 = vrot.slane %v398, %v402
        %v404 = vlaneseq
        %v405 = vshrl.u32 %v404, 7
        %v406 = vsub.s32 1, %v405
        %v407 = vrot.slane %v398, %v406
        %v408 = vlaneseq
        %v409 = vshrl.u32 %v408, 7
        %v410 = vsub.s32 2, %v409
        %v411 = vrot.slane %v398, %v410
        %v447 = vunpack.c.l.b16 %v366
        %v448 = vunpack.c.h.b16 %v366
        %v449 = vunpack.c.l.b16 %v367
        %v450 = vunpack.c.l.b16 %v368
        %v451 = vunpack.c.h.b16 %v368
        %v452 = vunpack.c.l.b16 %v369
        %v453 = vunpack.c.l.b16 %v370
        %v454 = vunpack.c.h.b16 %v370
        %v455 = vunpack.c.l.b16 %v371
        %v456 = vunpack.c.l.b16 %v372
        %v457 = vunpack.c.h.b16 %v372
        %v458 = vunpack.c.l.b16 %v373
        %v459 = vunpack.c.l.b16 %v374
        %v460 = vunpack.c.h.b16 %v374
        %v461 = vunpack.c.l.b16 %v375
        %v462 = vunpack.c.l.b16 %v376
        %v463 = vunpack.c.h.b16 %v376
        %v464 = vunpack.c.l.b16 %v377
        %v465 = vunpack.c.l.b16 %v378
        %v466 = vunpack.c.h.b16 %v378
        %v467 = vunpack.c.l.b16 %v379
        %v468 = vunpack.c.l.b16 %v380
        %v469 = vunpack.c.h.b16 %v380
        %v470 = vunpack.c.l.b16 %v381
        %v471 = vunpack.c.l.b16 %v382
        %v472 = vunpack.c.h.b16 %v382
        %v473 = vunpack.c.l.b16 %v383
        %v474 = vunpack.c.l.b16 %v384
        %v475 = vunpack.c.h.b16 %v384
        %v476 = vunpack.c.l.b16 %v385
        %v477 = vunpack.c.l.b16 %v386
        %v478 = vunpack.c.h.b16 %v386
        %v479 = vunpack.c.l.b16 %v387
        %v480 = vunpack.c.l.b16 %v388
        %v481 = vunpack.c.h.b16 %v388
        %v482 = vunpack.c.l.b16 %v389
        %v483 = vunpack.c.l.b16 %v390
        %v484 = vunpack.c.h.b16 %v390
        %v485 = vunpack.c.l.b16 %v391
        %v486 = vunpack.c.l.b16 %v392
        %v487 = vunpack.c.h.b16 %v392
        %v488 = vunpack.c.l.b16 %v393
        %v489 = vunpack.c.l.b16 %v394
        %v490 = vunpack.c.h.b16 %v394
        %v491 = vunpack.c.l.b16 %v395
        %v492 = vunpack.c.l.b16 %v396
        %v493 = vunpack.c.h.b16 %v396
        %v494 = vunpack.c.l.b16 %v397
        %v495 = vpack.c.b16 %v450, %v447
        %v496 = vpack.c.b16 %v451, %v448
        %v497 = vpack.c.b16 %v452, %v449
        %v498 = vpack.c.b16 %v456, %v453
        %v499 = vpack.c.b16 %v457, %v454
        %v500 = vpack.c.b16 %v458, %v455
        %v501 = vpack.c.b16 %v462, %v459
        %v502 = vpack.c.b16 %v463, %v460
        %v503 = vpack.c.b16 %v464, %v461
        %v504 = vpack.c.b16 %v468, %v465
        %v505 = vpack.c.b16 %v469, %v466
        %v506 = vpack.c.b16 %v470, %v467
        %v507 = vpack.c.b16 %v474, %v471
        %v508 = vpack.c.b16 %v475, %v472
        %v509 = vpack.c.b16 %v476, %v473
        %v510 = vpack.c.b16 %v480, %v477
        %v511 = vpack.c.b16 %v481, %v478
        %v512 = vpack.c.b16 %v482, %v479
        %v513 = vpack.c.b16 %v486, %v483
        %v514 = vpack.c.b16 %v487, %v484
        %v515 = vpack.c.b16 %v488, %v485
        %v516 = vpack.c.b16 %v492, %v489
        %v517 = vpack.c.b16 %v493, %v490
        %v518 = vpack.c.b16 %v494, %v491
        %543 = vmatprep.subr.bf16.mxu0 %v517
        %544 = vmatpush1.bf16.msra.mxu0 %v516
        %545 = vmatprep.subr.bf16.mxu0 %v514
        %546 = vmatpush1.bf16.msra.mxu0 %v513
        %547 = vmatprep.subr.bf16.mxu0 %v511
        %548 = vmatpush1.bf16.msra.mxu0 %v510
        %549 = vmatprep.subr.bf16.mxu0 %v508
        %550 = vmatpush1.bf16.msra.mxu0 %v507
        %551 = vmatprep.subr.bf16.mxu0 %v505
        %552 = vmatpush1.bf16.msra.mxu0 %v504
        %553 = vmatprep.subr.bf16.mxu0 %v502
        %554 = vmatpush1.bf16.msra.mxu0 %v501
        %555 = vmatprep.subr.bf16.mxu0 %v499
        %556 = vmatpush1.bf16.msra.mxu0 %v498
        %557 = vmatprep.subr.bf16.mxu0 %v496
        %558 = vmatpush1.bf16.msra.mxu0 %v495
        %559 = vmatprep.subr.bf16.mxu0 0
        %560 = vmatpush2.bf16.msra.mxu0 0
        %561 = vmatprep.subr.bf16.mxu0 0
        %562 = vmatpush2.bf16.msra.mxu0 0
        %563 = vmatprep.subr.bf16.mxu0 0
        %564 = vmatpush2.bf16.msra.mxu0 0
        %565 = vmatprep.subr.bf16.mxu0 0
        %566 = vmatpush2.bf16.msra.mxu0 0
        %567 = vmatprep.subr.bf16.mxu0 0
        %568 = vmatpush2.bf16.msra.mxu0 0
        %569 = vmatprep.subr.bf16.mxu0 0
        %570 = vmatpush2.bf16.msra.mxu0 0
        %571 = vmatprep.subr.bf16.mxu0 0
        %572 = vmatpush2.bf16.msra.mxu0 0
        %573 = vmatprep.subr.bf16.mxu0 0
        %574 = vmatpush2.bf16.msra.mxu0 0
        %575 = vmatprep.mubr.bf16.mxu0 0
        %576 = vmatmul.mubr.bf16.gmra.mxu0 %v365
        %v577 = vpop.f32.mrf.mxu0
        %v578 = vadd.f32 %v403, %v577
        %v579 = vpop.f32.mrf.mxu0
        %v580 = vadd.f32 %v407, %v579
        %v581 = vpop.f32.mrf.mxu0
        %v582 = vpop.f32.mrf.mxu0
        %583 = vdwg.mxu0
        %584 = vmatprep.subr.bf16.mxu0 0
        %585 = vmatpush1.bf16.msra.mxu0 %v518
        %586 = vmatprep.subr.bf16.mxu0 0
        %587 = vmatpush1.bf16.msra.mxu0 %v515
        %588 = vmatprep.subr.bf16.mxu0 0
        %589 = vmatpush1.bf16.msra.mxu0 %v512
        %590 = vmatprep.subr.bf16.mxu0 0
        %591 = vmatpush1.bf16.msra.mxu0 %v509
        %592 = vmatprep.subr.bf16.mxu0 0
        %593 = vmatpush1.bf16.msra.mxu0 %v506
        %594 = vmatprep.subr.bf16.mxu0 0
        %595 = vmatpush1.bf16.msra.mxu0 %v503
        %596 = vmatprep.subr.bf16.mxu0 0
        %597 = vmatpush1.bf16.msra.mxu0 %v500
        %598 = vmatprep.subr.bf16.mxu0 0
        %599 = vmatpush1.bf16.msra.mxu0 %v497
        %600 = vmatprep.subr.bf16.mxu0 0
        %601 = vmatpush2.bf16.msra.mxu0 0
        %602 = vmatprep.subr.bf16.mxu0 0
        %603 = vmatpush2.bf16.msra.mxu0 0
        %604 = vmatprep.subr.bf16.mxu0 0
        %605 = vmatpush2.bf16.msra.mxu0 0
        %606 = vmatprep.subr.bf16.mxu0 0
        %607 = vmatpush2.bf16.msra.mxu0 0
        %608 = vmatprep.subr.bf16.mxu0 0
        %609 = vmatpush2.bf16.msra.mxu0 0
        %610 = vmatprep.subr.bf16.mxu0 0
        %611 = vmatpush2.bf16.msra.mxu0 0
        %612 = vmatprep.subr.bf16.mxu0 0
        %613 = vmatpush2.bf16.msra.mxu0 0
        %614 = vmatprep.subr.bf16.mxu0 0
        %615 = vmatpush2.bf16.msra.mxu0 0
        %616 = vmatprep.mubr.bf16.mxu0 0
        %617 = vmatmul.mubr.bf16.gmra.mxu0 %v365
        %v618 = vpop.f32.mrf.mxu0
        %v619 = vadd.f32 %v411, %v618
        %v620 = vpop.f32.mrf.mxu0
        %v621 = vpop.f32.mrf.mxu0
        %v622 = vpop.f32.mrf.mxu0
        %623 = vdwg.mxu0
        %v624 = vmul.f32 %v578, 0.125
        %626 = vrot.lane.b32.xlu0 %v624, 64
        %v627 = vpop.permute.xlu0 %626
        %v629 = vcombine.high %v624, 0.0
        %v631 = vunpack.c.l.s4 1983009808
        %v632 = vunpack.c.0.s8 %v631
        %v633 = vlaneseq
        %v634 = vshrl.u32 %v633, 7
        %v635 = vsub.s32 %v632, %v634
        %v636 = vrot.slane %v624, %v635
        %v638 = vunpack.c.l.s4 1983009808
        %v639 = vunpack.c.0.s8 %v638
        %v640 = vlaneseq
        %v641 = vshrl.u32 %v640, 7
        %v642 = vsub.s32 %v639, %v641
        %v643 = vrot.slane %v629, %v642
        %v644 = vcombine.high %v627, 0.0
        %v646 = vunpack.c.l.s4 1983009808
        %v647 = vunpack.c.0.s8 %v646
        %v648 = vlaneseq
        %v649 = vshrl.u32 %v648, 7
        %v650 = vsub.s32 %v647, %v649
        %v651 = vrot.slane %v627, %v650
        %v653 = vunpack.c.l.s4 1983009808
        %v654 = vunpack.c.0.s8 %v653
        %v655 = vlaneseq
        %v656 = vshrl.u32 %v655, 7
        %v657 = vsub.s32 %v654, %v656
        %v658 = vrot.slane %v644, %v657
        %v659 = vcombine.low %v636, %v651
        %v660 = vcombine.high %v636, %v651
        %v662 = vunpack.c.l.s4 1934713408
        %v663 = vunpack.c.0.s8 %v662
        %v664 = vlaneseq
        %v665 = vshrl.u32 %v664, 7
        %v666 = vsub.s32 %v663, %v665
        %v667 = vrot.slane %v659, %v666
        %v669 = vunpack.c.l.s4 1934713408
        %v670 = vunpack.c.0.s8 %v669
        %v671 = vlaneseq
        %v672 = vshrl.u32 %v671, 7
        %v673 = vsub.s32 %v670, %v672
        %v674 = vrot.slane %v660, %v673
        %v675 = vcombine.low %v643, %v658
        %v676 = vcombine.high %v643, %v658
        %v678 = vunpack.c.l.s4 1934713408
        %v679 = vunpack.c.0.s8 %v678
        %v680 = vlaneseq
        %v681 = vshrl.u32 %v680, 7
        %v682 = vsub.s32 %v679, %v681
        %v683 = vrot.slane %v675, %v682
        %v685 = vunpack.c.l.s4 1934713408
        %v686 = vunpack.c.0.s8 %v685
        %v687 = vlaneseq
        %v688 = vshrl.u32 %v687, 7
        %v689 = vsub.s32 %v686, %v688
        %v690 = vrot.slane %v676, %v689
        %v691 = vcombine.high %v667, 0.0
        %v692 = vcombine.high %v674, 0.0
        %v693 = vcombine.high %v683, 0.0
        %v694 = vcombine.high %v690, 0.0
        %v695 = vcombine.low %v667, %v674
        %v697 = vunpack.c.l.s4 1983009808
        %v698 = vunpack.c.0.s8 %v697
        %v699 = vlaneseq
        %v700 = vshrl.u32 %v699, 7
        %v701 = vsub.s32 %v698, %v700
        %v702 = vrot.slane %v695, %v701
        %v703 = vcombine.low %v691, %v692
        %v705 = vunpack.c.l.s4 1983009808
        %v706 = vunpack.c.0.s8 %v705
        %v707 = vlaneseq
        %v708 = vshrl.u32 %v707, 7
        %v709 = vsub.s32 %v706, %v708
        %v710 = vrot.slane %v703, %v709
        %v711 = vcombine.low %v683, %v690
        %v713 = vunpack.c.l.s4 1983009808
        %v714 = vunpack.c.0.s8 %v713
        %v715 = vlaneseq
        %v716 = vshrl.u32 %v715, 7
        %v717 = vsub.s32 %v714, %v716
        %v718 = vrot.slane %v711, %v717
        %v719 = vcombine.low %v693, %v694
        %v721 = vunpack.c.l.s4 1983009808
        %v722 = vunpack.c.0.s8 %v721
        %v723 = vlaneseq
        %v724 = vshrl.u32 %v723, 7
        %v725 = vsub.s32 %v722, %v724
        %v726 = vrot.slane %v719, %v725
        %v727 = vcombine.low %v702, %v710
        %v729 = vunpack.c.l.s4 1934713408
        %v730 = vunpack.c.0.s8 %v729
        %v731 = vlaneseq
        %v732 = vshrl.u32 %v731, 7
        %v733 = vsub.s32 %v730, %v732
        %v734 = vrot.slane %v727, %v733
        %v735 = vcombine.low %v718, %v726
        %v737 = vunpack.c.l.s4 1934713408
        %v738 = vunpack.c.0.s8 %v737
        %v739 = vlaneseq
        %v740 = vshrl.u32 %v739, 7
        %v741 = vsub.s32 %v738, %v740
        %v742 = vrot.slane %v735, %v741
        %v743 = vcombine.low %v734, %v742
        %v744 = vcombine.high %v734, %v742
        %v745 = vpack.c.bf16 %v743, %v743
        %v746 = vpack.c.bf16 %v744, %v744
        %vm747 = vcmask 519168
        %748 = vst.msk [vmem:[%s320] sm:$0xf] %vm747, %v745
        %749 = vst.msk [vmem:[%s320 + $0x4] sm:$0xf] %vm747, %v746
        %751 = vrot.lane.b32.xlu0 %v580, 64
        %v752 = vpop.permute.xlu0 %751
        %v754 = vcombine.high %v580, 0.0
        %v756 = vunpack.c.l.s4 1983009808
        %v757 = vunpack.c.0.s8 %v756
        %v758 = vlaneseq
        %v759 = vshrl.u32 %v758, 7
        %v760 = vsub.s32 %v757, %v759
        %v761 = vrot.slane %v580, %v760
        %v763 = vunpack.c.l.s4 1983009808
        %v764 = vunpack.c.0.s8 %v763
        %v765 = vlaneseq
        %v766 = vshrl.u32 %v765, 7
        %v767 = vsub.s32 %v764, %v766
        %v768 = vrot.slane %v754, %v767
        %v769 = vcombine.high %v752, 0.0
        %v771 = vunpack.c.l.s4 1983009808
        %v772 = vunpack.c.0.s8 %v771
        %v773 = vlaneseq
        %v774 = vshrl.u32 %v773, 7
        %v775 = vsub.s32 %v772, %v774
        %v776 = vrot.slane %v752, %v775
        %v778 = vunpack.c.l.s4 1983009808
        %v779 = vunpack.c.0.s8 %v778
        %v780 = vlaneseq
        %v781 = vshrl.u32 %v780, 7
        %v782 = vsub.s32 %v779, %v781
        %v783 = vrot.slane %v769, %v782
        %v784 = vcombine.low %v761, %v776
        %v785 = vcombine.high %v761, %v776
        %v787 = vunpack.c.l.s4 1934713408
        %v788 = vunpack.c.0.s8 %v787
        %v789 = vlaneseq
        %v790 = vshrl.u32 %v789, 7
        %v791 = vsub.s32 %v788, %v790
        %v792 = vrot.slane %v784, %v791
        %v794 = vunpack.c.l.s4 1934713408
        %v795 = vunpack.c.0.s8 %v794
        %v796 = vlaneseq
        %v797 = vshrl.u32 %v796, 7
        %v798 = vsub.s32 %v795, %v797
        %v799 = vrot.slane %v785, %v798
        %v800 = vcombine.low %v768, %v783
        %v801 = vcombine.high %v768, %v783
        %v803 = vunpack.c.l.s4 1934713408
        %v804 = vunpack.c.0.s8 %v803
        %v805 = vlaneseq
        %v806 = vshrl.u32 %v805, 7
        %v807 = vsub.s32 %v804, %v806
        %v808 = vrot.slane %v800, %v807
        %v810 = vunpack.c.l.s4 1934713408
        %v811 = vunpack.c.0.s8 %v810
        %v812 = vlaneseq
        %v813 = vshrl.u32 %v812, 7
        %v814 = vsub.s32 %v811, %v813
        %v815 = vrot.slane %v801, %v814
        %v816 = vcombine.high %v792, 0.0
        %v817 = vcombine.high %v799, 0.0
        %v818 = vcombine.high %v808, 0.0
        %v819 = vcombine.high %v815, 0.0
        %v820 = vcombine.low %v792, %v799
        %v822 = vunpack.c.l.s4 1983009808
        %v823 = vunpack.c.0.s8 %v822
        %v824 = vlaneseq
        %v825 = vshrl.u32 %v824, 7
        %v826 = vsub.s32 %v823, %v825
        %v827 = vrot.slane %v820, %v826
        %v828 = vcombine.low %v816, %v817
        %v830 = vunpack.c.l.s4 1983009808
        %v831 = vunpack.c.0.s8 %v830
        %v832 = vlaneseq
        %v833 = vshrl.u32 %v832, 7
        %v834 = vsub.s32 %v831, %v833
        %v835 = vrot.slane %v828, %v834
        %v836 = vcombine.low %v808, %v815
        %v838 = vunpack.c.l.s4 1983009808
        %v839 = vunpack.c.0.s8 %v838
        %v840 = vlaneseq
        %v841 = vshrl.u32 %v840, 7
        %v842 = vsub.s32 %v839, %v841
        %v843 = vrot.slane %v836, %v842
        %v844 = vcombine.low %v818, %v819
        %v846 = vunpack.c.l.s4 1983009808
        %v847 = vunpack.c.0.s8 %v846
        %v848 = vlaneseq
        %v849 = vshrl.u32 %v848, 7
        %v850 = vsub.s32 %v847, %v849
        %v851 = vrot.slane %v844, %v850
        %v852 = vcombine.low %v827, %v835
        %v854 = vunpack.c.l.s4 1934713408
        %v855 = vunpack.c.0.s8 %v854
        %v856 = vlaneseq
        %v857 = vshrl.u32 %v856, 7
        %v858 = vsub.s32 %v855, %v857
        %v859 = vrot.slane %v852, %v858
        %v860 = vcombine.low %v843, %v851
        %v862 = vunpack.c.l.s4 1934713408
        %v863 = vunpack.c.0.s8 %v862
        %v864 = vlaneseq
        %v865 = vshrl.u32 %v864, 7
        %v866 = vsub.s32 %v863, %v865
        %v867 = vrot.slane %v860, %v866
        %v868 = vcombine.low %v859, %v867
        %v869 = vcombine.high %v859, %v867
        %v870 = vpack.c.bf16 %v868, %v868
        %v871 = vpack.c.bf16 %v869, %v869
        %872 = vst.msk [vmem:[%s327] sm:$0xf] %vm747, %v870
        %873 = vst.msk [vmem:[%s327 + $0x4] sm:$0xf] %vm747, %v871
        %875 = vrot.lane.b32.xlu0 %v619, 64
        %v876 = vpop.permute.xlu0 %875
        %v878 = vcombine.high %v619, 0.0
        %v880 = vunpack.c.l.s4 1983009808
        %v881 = vunpack.c.0.s8 %v880
        %v882 = vlaneseq
        %v883 = vshrl.u32 %v882, 7
        %v884 = vsub.s32 %v881, %v883
        %v885 = vrot.slane %v619, %v884
        %v887 = vunpack.c.l.s4 1983009808
        %v888 = vunpack.c.0.s8 %v887
        %v889 = vlaneseq
        %v890 = vshrl.u32 %v889, 7
        %v891 = vsub.s32 %v888, %v890
        %v892 = vrot.slane %v878, %v891
        %v893 = vcombine.high %v876, 0.0
        %v895 = vunpack.c.l.s4 1983009808
        %v896 = vunpack.c.0.s8 %v895
        %v897 = vlaneseq
        %v898 = vshrl.u32 %v897, 7
        %v899 = vsub.s32 %v896, %v898
        %v900 = vrot.slane %v876, %v899
        %v902 = vunpack.c.l.s4 1983009808
        %v903 = vunpack.c.0.s8 %v902
        %v904 = vlaneseq
        %v905 = vshrl.u32 %v904, 7
        %v906 = vsub.s32 %v903, %v905
        %v907 = vrot.slane %v893, %v906
        %v908 = vcombine.low %v885, %v900
        %v909 = vcombine.high %v885, %v900
        %v911 = vunpack.c.l.s4 1934713408
        %v912 = vunpack.c.0.s8 %v911
        %v913 = vlaneseq
        %v914 = vshrl.u32 %v913, 7
        %v915 = vsub.s32 %v912, %v914
        %v916 = vrot.slane %v908, %v915
        %v918 = vunpack.c.l.s4 1934713408
        %v919 = vunpack.c.0.s8 %v918
        %v920 = vlaneseq
        %v921 = vshrl.u32 %v920, 7
        %v922 = vsub.s32 %v919, %v921
        %v923 = vrot.slane %v909, %v922
        %v924 = vcombine.low %v892, %v907
        %v925 = vcombine.high %v892, %v907
        %v927 = vunpack.c.l.s4 1934713408
        %v928 = vunpack.c.0.s8 %v927
        %v929 = vlaneseq
        %v930 = vshrl.u32 %v929, 7
        %v931 = vsub.s32 %v928, %v930
        %v932 = vrot.slane %v924, %v931
        %v934 = vunpack.c.l.s4 1934713408
        %v935 = vunpack.c.0.s8 %v934
        %v936 = vlaneseq
        %v937 = vshrl.u32 %v936, 7
        %v938 = vsub.s32 %v935, %v937
        %v939 = vrot.slane %v925, %v938
        %v940 = vcombine.high %v916, 0.0
        %v941 = vcombine.high %v923, 0.0
        %v942 = vcombine.high %v932, 0.0
        %v943 = vcombine.high %v939, 0.0
        %v944 = vcombine.low %v916, %v923
        %v946 = vunpack.c.l.s4 1983009808
        %v947 = vunpack.c.0.s8 %v946
        %v948 = vlaneseq
        %v949 = vshrl.u32 %v948, 7
        %v950 = vsub.s32 %v947, %v949
        %v951 = vrot.slane %v944, %v950
        %v952 = vcombine.low %v940, %v941
        %v954 = vunpack.c.l.s4 1983009808
        %v955 = vunpack.c.0.s8 %v954
        %v956 = vlaneseq
        %v957 = vshrl.u32 %v956, 7
        %v958 = vsub.s32 %v955, %v957
        %v959 = vrot.slane %v952, %v958
        %v960 = vcombine.low %v932, %v939
        %v962 = vunpack.c.l.s4 1983009808
        %v963 = vunpack.c.0.s8 %v962
        %v964 = vlaneseq
        %v965 = vshrl.u32 %v964, 7
        %v966 = vsub.s32 %v963, %v965
        %v967 = vrot.slane %v960, %v966
        %v968 = vcombine.low %v942, %v943
        %v970 = vunpack.c.l.s4 1983009808
        %v971 = vunpack.c.0.s8 %v970
        %v972 = vlaneseq
        %v973 = vshrl.u32 %v972, 7
        %v974 = vsub.s32 %v971, %v973
        %v975 = vrot.slane %v968, %v974
        %v976 = vcombine.low %v951, %v959
        %v978 = vunpack.c.l.s4 1934713408
        %v979 = vunpack.c.0.s8 %v978
        %v980 = vlaneseq
        %v981 = vshrl.u32 %v980, 7
        %v982 = vsub.s32 %v979, %v981
        %v983 = vrot.slane %v976, %v982
        %v984 = vcombine.low %v967, %v975
        %v986 = vunpack.c.l.s4 1934713408
        %v987 = vunpack.c.0.s8 %v986
        %v988 = vlaneseq
        %v989 = vshrl.u32 %v988, 7
        %v990 = vsub.s32 %v987, %v989
        %v991 = vrot.slane %v984, %v990
        %v992 = vcombine.low %v983, %v991
        %v993 = vcombine.high %v983, %v991
        %v994 = vpack.c.bf16 %v992, %v992
        %v995 = vpack.c.bf16 %v993, %v993
        %996 = vst.msk [vmem:[%s334] sm:$0xf] %vm747, %v994
        %997 = vst.msk [vmem:[%s334 + $0x4] sm:$0xf] %vm747, %v995
        %s998 = sand.u32 %s146, 1
        %s999 = scalar_lea.sflag [#allocation4], %s998
        %s1000 = sand.u32 %s146, 1
        %s1001 = smul.addr %s1000, 8
        %s1002 = scalar_lea.vmem [#allocation7], %s1001
        %s1003 = sand.u32 %s28, 1
        %s1004 = scalar_lea.sflag [#allocation9], %s1003
        %s1005 = sand.u32 %s174, 1
        %s1006 = smul.addr %s1005, 8
        %s1007 = scalar_lea.vmem [#allocation8], %s1006
        %s1008 = sand.u32 %s28, 1
        %s1009 = scalar_lea.sflag [#allocation9], %s1008
        %s1010 = sand.u32 %s202, 1
        %s1011 = smul.addr %s1010, 8
        %s1012 = scalar_lea.vmem [#allocation10], %s1011
        // Predicated region
        $region45: #{tpu_custom_call.1} parent=35 // pred_check
          %p1013 = pneg %p156
        $region46: #{tpu_custom_call.1} parent=35 // pred_check_branch
          %1015 = sbr.rel (%p1013) target = $region48
        $region47: #{tpu_custom_call.1} parent=35 // pred_region
          %s1017 = ssub.s32 128, 128
          %1018 = vsyncadd %s999, %s1017
          %s1019 = smul.addr %s32, 4
          %s1020 = sadd.s32 %s33, %s1019
          %s1021 = smul.addr %s1020, 64
          %s1022 = scalar_lea.hbm %s4, %s1021
          %s1023 = sshll.u32 %s1002, 4
          %s1024 = int_to_ptr.vmem [resolvable:$true] %s1023
          %1029 = dma.vmem_to_hbm [thread:$0]  %s1024, 128, %s1022, %s999, 64, 128, 4
        $region48: #{tpu_custom_call.1} parent=35 // pred_fallthru
          _
        // Predicated region
        $region49: #{tpu_custom_call.1} parent=35 // pred_check
          %p1030 = pneg %p184
        $region50: #{tpu_custom_call.1} parent=35 // pred_check_branch
          %1032 = sbr.rel (%p1030) target = $region52
        $region51: #{tpu_custom_call.1} parent=35 // pred_region
          %s1034 = ssub.s32 128, 128
          %1035 = vsyncadd %s1004, %s1034
          %s1036 = smul.addr %s32, 4
          %s1037 = sadd.s32 %s33, %s1036
          %s1038 = smul.addr %s1037, 64
          %s1039 = scalar_lea.hbm %s5, %s1038
          %s1040 = sshll.u32 %s1007, 4
          %s1041 = int_to_ptr.vmem [resolvable:$true] %s1040
          %1046 = dma.vmem_to_hbm [thread:$0]  %s1041, 128, %s1039, %s1004, 64, 128, 4
        $region52: #{tpu_custom_call.1} parent=35 // pred_fallthru
          _
        // Predicated region
        $region53: #{tpu_custom_call.1} parent=35 // pred_check
          %p1047 = pneg %p212
        $region54: #{tpu_custom_call.1} parent=35 // pred_check_branch
          %1049 = sbr.rel (%p1047) target = $region56
        $region55: #{tpu_custom_call.1} parent=35 // pred_region
          %s1051 = ssub.s32 128, 128
          %1052 = vsyncadd %s1009, %s1051
          %s1053 = smul.addr %s32, 4
          %s1054 = sadd.s32 %s33, %s1053
          %s1055 = smul.addr %s1054, 64
          %s1056 = scalar_lea.hbm %s6, %s1055
          %s1057 = sshll.u32 %s1012, 4
          %s1058 = int_to_ptr.vmem [resolvable:$true] %s1057
          %1063 = dma.vmem_to_hbm [thread:$0]  %s1058, 128, %s1056, %s1009, 64, 128, 4
        $region56: #{tpu_custom_call.1} parent=35 // pred_fallthru
          _
      $region36: #{tpu_custom_call.1} parent=5 // pred_fallthru
        _
      %p1064 = scmp.le.s32.totalorder 2, %s23
      // Predicated region
      $region57: #{tpu_custom_call.1} parent=5 // pred_check
        %p1065 = pneg %p1064
      $region58: #{tpu_custom_call.1} parent=5 // pred_check_branch
        %1067 = sbr.rel (%p1065) target = $region60
      $region59: #{tpu_custom_call.1} parent=5 // pred_region
        %s1068 = ssub.s32 %s23, 2
        // Predicated region
        $region61: #{tpu_custom_call.1} parent=59 // pred_check
          %p1069 = pneg %p162
        $region62: #{tpu_custom_call.1} parent=59 // pred_check_branch
          %1071 = sbr.rel (%p1069) target = $region64
        $region63: #{tpu_custom_call.1} parent=59 // pred_region
          %s1072 = sand.u32 %s147, 1
          %s1073 = scalar_lea.sflag [#allocation4], %s1072
          %s1074 = sand.u32 %s147, 1
          %s1075 = smul.addr %s1074, 8
          %s1076 = scalar_lea.vmem [#allocation7], %s1075
          %1077 = dma.done %s1073, 128
        $region64: #{tpu_custom_call.1} parent=59 // pred_fallthru
          _
        // Predicated region
        $region65: #{tpu_custom_call.1} parent=59 // pred_check
          %p1078 = pneg %p190
        $region66: #{tpu_custom_call.1} parent=59 // pred_check_branch
          %1080 = sbr.rel (%p1078) target = $region68
        $region67: #{tpu_custom_call.1} parent=59 // pred_region
          %s1081 = sand.u32 %s29, 1
          %s1082 = scalar_lea.sflag [#allocation9], %s1081
          %s1083 = sand.u32 %s175, 1
          %s1084 = smul.addr %s1083, 8
          %s1085 = scalar_lea.vmem [#allocation8], %s1084
          %1086 = dma.done %s1082, 128
        $region68: #{tpu_custom_call.1} parent=59 // pred_fallthru
          _
        // Predicated region
        $region69: #{tpu_custom_call.1} parent=59 // pred_check
          %p1087 = pneg %p218
        $region70: #{tpu_custom_call.1} parent=59 // pred_check_branch
          %1089 = sbr.rel (%p1087) target = $region72
        $region71: #{tpu_custom_call.1} parent=59 // pred_region
          %s1090 = sand.u32 %s29, 1
          %s1091 = scalar_lea.sflag [#allocation9], %s1090
          %s1092 = sand.u32 %s203, 1
          %s1093 = smul.addr %s1092, 8
          %s1094 = scalar_lea.vmem [#allocation10], %s1093
          %1095 = dma.done %s1091, 128
        $region72: #{tpu_custom_call.1} parent=59 // pred_fallthru
          _
      $region60: #{tpu_custom_call.1} parent=5 // pred_fallthru
        _
    $region6: #{tpu_custom_call.1} parent=1 // loop_footer
      %s27 = sadd.s32 1, %s23
    $region7: #{tpu_custom_call.1} parent=1 // loop_footer_branch
      %22 = sbr.rel target = $region3
    $region8: #{tpu_custom_call.1} parent=1 // loop_exit
      _
    %1096 = vsyncpa [#allocation3], 1
    %s1097 = scalar_lea.sflag [#allocation3], 1
    %1098 = vsyncpa %s1097, 1
    %1099 = vsyncpa [#allocation6], 1
    %1100 = vsyncpa [#allocation4], 1
    %s1101 = scalar_lea.sflag [#allocation4], 1
    %1102 = vsyncpa %s1101, 1
    %1103 = vsyncpa [#allocation9], 1
    %s1104 = scalar_lea.sflag [#allocation9], 1
    %1105 = vsyncpa %s1104, 1

</llo_original>
